<compile_context>
chip_gen: v7x
topology: tpu7x:2x2x1
jax: 0.10.0
libtpu: 0.0.40
codegen_flags: <defaults>
</compile_context>

<pallas_src>
import functools

import jax
import jax.numpy as jnp
from jax.experimental import pallas as pl
from jax.experimental.pallas import tpu as pltpu


# ----------------------------- Pallas kernel --------------------------------
def meta_network_kernel(x_ref, wc_ref, bc_ref, w2_ref, b2_ref, out_ref):
    """Per batch tile:  sigmoid( relu(x @ W_c + b_c) . w2 + b2 ) -> (1, tile_b)."""
    # Single MXU matmul: meta-linears + predictor Linear(fin->64) folded into
    # one [fin, 64] weight (fold done in the wrapper).
    hidden = jnp.dot(x_ref[...], wc_ref[...], preferred_element_type=jnp.float32)
    hidden = jnp.maximum(hidden + bc_ref[...], 0.0)          # bias + ReLU (VPU)

    # Lane-dense final layer: transpose (tile_b, 64) -> (64, tile_b) on the
    # XLU (has slack here), then the 64->1 contraction is a cheap sublane
    # reduce.  Every subsequent per-row op (b2 add, sigmoid, store) operates
    # on dense (1, tile_b) vregs and the stores are unmasked lane-dense vst.
    hidden_t = hidden.T                                      # (64, tile_b)
    logits = jnp.sum(hidden_t * w2_ref[...], axis=0, keepdims=True)  # (1, tile_b)
    out_ref[...] = jax.nn.sigmoid(logits + b2_ref[0, 0])     # EUP exp, b2 from SMEM


def run_meta_network_kernel(x, w_c, b_c, w2_col, b2, *, max_tile_rows=8192):
    B, fin = x.shape
    hid = w_c.shape[1]

    # Even split of the batch across tiles (multiple of 8 sublanes), capped at
    # max_tile_rows so double-buffered tiles stay a few MB even on v7x.
    num_tiles = -(-B // max_tile_rows)                # cdiv
    tile_b = -(-B // num_tiles)                       # even split
    tile_b = ((tile_b + 7) // 8) * 8                  # sublane multiple
    b_pad = num_tiles * tile_b
    if b_pad != B:
        x = jnp.pad(x, ((0, b_pad - B), (0, 0)))

    cost = pl.CostEstimate(
        flops=2 * b_pad * fin * hid + 2 * b_pad * hid,
        transcendentals=b_pad,
        bytes_accessed=4 * (b_pad * fin + fin * hid + 2 * hid + 1 + b_pad),
    )

    out = pl.pallas_call(
        meta_network_kernel,
        out_shape=jax.ShapeDtypeStruct((num_tiles, tile_b), jnp.float32),
        grid=(num_tiles,),
        in_specs=[
            pl.BlockSpec((tile_b, fin), lambda i: (i, 0)),       # activations tile
            pl.BlockSpec((fin, hid), lambda i: (0, 0)),          # folded W_c
            pl.BlockSpec((1, hid), lambda i: (0, 0)),            # folded bias b_c
            pl.BlockSpec((hid, 1), lambda i: (0, 0)),            # w2 as a column
            pl.BlockSpec(memory_space=pltpu.MemorySpace.SMEM),   # b2 scalar
        ],
        out_specs=pl.BlockSpec((1, tile_b), lambda i: (i, 0)),   # lane-dense rows
        compiler_params=pltpu.CompilerParams(
            dimension_semantics=("parallel",),
            # Let XLA fuse the gather/mean/concat producer of x into the
            # kernel input instead of round-tripping x through HBM.
            allow_input_fusion=[True, False, False, False, False],
            vmem_limit_bytes=32 * 1024 * 1024,
        ),
        cost_estimate=cost,
    )(x, w_c, b_c, w2_col, b2)

    # (num_tiles, tile_b) row-major == padded batch order.
    return out.reshape(b_pad)[:B][:, None]


# ------------------------------- model setup ---------------------------------
def init_params(key, embedding_sizes, target_idxs, meta_idxs):
    keys = jax.random.split(key, 16)
    kiter = iter(keys)

    # Embedding tables (frozen base-model embeddings)
    embeddings = [jax.random.normal(next(kiter), (vocab, dim), jnp.float32) * 0.1
                  for vocab, dim in embedding_sizes]

    # Meta linear layers: one per target idx, Linear(len(meta_idxs) -> dim_i),
    # fused into a single [M, T] weight (outputs concatenated along axis 1).
    M = len(meta_idxs)
    wm_parts, bm_parts = [], []
    for i in target_idxs:
        d = embedding_sizes[i][1]
        wm_parts.append(jax.random.normal(next(kiter), (M, d), jnp.float32) * 0.1)
        bm_parts.append(jax.random.normal(next(kiter), (d,), jnp.float32) * 0.1)
    wm = jnp.concatenate(wm_parts, axis=1)                     # [M, T]
    bm = jnp.concatenate(bm_parts, axis=0)[None, :]            # [1, T]

    # Frozen base-model predictor: Linear(total->64) -> ReLU -> Linear(64->1) -> Sigmoid
    total_dim = sum(d for _, d in embedding_sizes)
    w1 = jax.random.normal(next(kiter), (total_dim, 64), jnp.float32) * 0.1
    b1 = jax.random.normal(next(kiter), (64,), jnp.float32)[None, :] * 0.1
    w2 = jax.random.normal(next(kiter), (64, 1), jnp.float32) * 0.1
    b2 = jax.random.normal(next(kiter), (1,), jnp.float32)[None, :] * 0.1

    return dict(embeddings=embeddings, wm=wm, bm=bm, w1=w1, b1=b1, w2=w2, b2=b2)


def meta_network_forward(params, inputs, embedding_sizes, target_idxs, meta_idxs,
                         max_tile_rows=8192, min_kernel_batch=0):
    """Forward pass matching MetaNetwork.forward. inputs: int32 [B, num_features]."""
    all_idx = list(range(len(embedding_sizes)))
    other_idxs = [i for i in all_idx if i not in target_idxs]
    emb = params["embeddings"]

    # --- tiny plain-JAX glue: embedding gathers + per-feature mean ---
    # TODO(synk): the heterogeneous per-feature table gathers could be pulled
    # into the kernel via scalar-prefetched indices + one-hot matmuls; kept as
    # XLA glue here since the tables/dims are tiny and data-dependent.
    other_embs = jnp.concatenate(
        [emb[i][inputs[:, i]] for i in other_idxs], axis=1)            # [B, O]
    meta_vec = jnp.concatenate(
        [jnp.mean(emb[i][inputs[:, i]], axis=1, keepdims=True)
         for i in meta_idxs], axis=1)                                   # [B, M]
    x = jnp.concatenate([meta_vec, other_embs], axis=1).astype(jnp.float32)  # [B, M+O]

    # --- algebraic fold of the frozen meta-linears into the frozen predictor ---
    #   h = cat([meta_vec @ wm + bm, other], 1); hidden = relu(h @ w1 + b1)
    #     = relu(meta_vec @ (wm @ w1m) + other @ w1o + (bm @ w1m + b1))
    # (h column order is [meta-embedding block | other block], exactly as in
    #  MetaNetwork.forward, so the row split of w1 at T matches the reference.)
    T = sum(embedding_sizes[i][1] for i in target_idxs)
    w1m = params["w1"][:T, :]
    w1o = params["w1"][T:, :]
    w_c = jnp.concatenate([params["wm"] @ w1m, w1o], axis=0)           # [M+O, 64]
    b_c = params["bm"] @ w1m + params["b1"]                            # [1, 64]
    w2_col = params["w2"]                                              # [64, 1]
    b2 = params["b2"]                                                  # [1, 1]

    if x.shape[0] < min_kernel_batch:
        # Single-tile tiny batches: custom-call + pipeline setup overhead
        # dwarfs the work; let XLA fuse gather->matmul->sigmoid directly.
        hidden = jnp.maximum(x @ w_c + b_c, 0.0)
        return jax.nn.sigmoid(hidden @ w2_col + b2)

    return run_meta_network_kernel(x, w_c, b_c, w2_col, b2,
                                   max_tile_rows=max_tile_rows)


def meta_network_reference(params, inputs, embedding_sizes, target_idxs, meta_idxs):
    """Pure-JAX reference mirroring the PyTorch forward, for correctness check."""
    all_idx = list(range(len(embedding_sizes)))
    other_idxs = [i for i in all_idx if i not in target_idxs]
    emb = params["embeddings"]

    other_embs = [emb[i][inputs[:, i]] for i in other_idxs]
    meta_feature_embeddings = [emb[i][inputs[:, i]] for i in meta_idxs]
    meta_vec = jnp.concatenate(
        [jnp.mean(e, axis=1)[:, None] for e in meta_feature_embeddings], axis=1)
    meta_embeddings = meta_vec @ params["wm"] + params["bm"]
    h = jnp.concatenate([meta_embeddings] + other_embs, axis=1)
    hidden = jnp.maximum(h @ params["w1"] + params["b1"], 0.0)
    return jax.nn.sigmoid(hidden @ params["w2"] + params["b2"])


# ----------------------------------- main ------------------------------------
if __name__ == "__main__":
    # Base model config: 4 categorical features with (vocab, embedding_dim)
    embedding_sizes = [(10, 8), (20, 16), (30, 8), (40, 16)]
    target_idxs = [0, 1]   # features whose embeddings are replaced by meta-embeddings
    meta_idxs = [2, 3]     # features feeding the meta network

    key = jax.random.PRNGKey(0)
    pkey, ikey_small, ikey_large = jax.random.split(key, 3)
    params = init_params(pkey, embedding_sizes, target_idxs, meta_idxs)

    def make_inputs(k, b):
        cols = []
        ks = jax.random.split(k, len(embedding_sizes))
        for kk, (vocab, _) in zip(ks, embedding_sizes):
            cols.append(jax.random.randint(kk, (b, 1), 0, vocab, dtype=jnp.int32))
        return jnp.concatenate(cols, axis=1)

    ref_fn = functools.partial(meta_network_reference,
                               embedding_sizes=embedding_sizes,
                               target_idxs=target_idxs, meta_idxs=meta_idxs)

    # --- small, spec-consistent batch (single tile) ---
    B_small = 8
    inputs_small = make_inputs(ikey_small, B_small)
    fwd_small = jax.jit(functools.partial(
        meta_network_forward, embedding_sizes=embedding_sizes,
        target_idxs=target_idxs, meta_idxs=meta_idxs))
    out_small = jax.block_until_ready(fwd_small(params, inputs_small))
    ref_small = ref_fn(params, inputs_small)
    assert out_small.shape == (B_small, 1), out_small.shape
    assert jnp.allclose(out_small, ref_small, atol=1e-5, rtol=1e-5), (out_small, ref_small)

    # --- larger batch exercising the multi-tile grid + even-split padding ---
    B_large = 1000
    inputs_large = make_inputs(ikey_large, B_large)
    fwd_large = jax.jit(functools.partial(
        meta_network_forward, embedding_sizes=embedding_sizes,
        target_idxs=target_idxs, meta_idxs=meta_idxs,
        max_tile_rows=256))   # force 4 tiles of 256 rows (24 padded rows)
    out_large = jax.block_until_ready(fwd_large(params, inputs_large))
    ref_large = ref_fn(params, inputs_large)
    assert out_large.shape == (B_large, 1), out_large.shape
    assert jnp.allclose(out_large, ref_large, atol=1e-5, rtol=1e-5)

    print("KERNEL_OK")
</pallas_src>

<mosaic_0001>
module attributes {stable_mosaic.version = 11 : i64} {
  func.func @meta_network_kernel(%arg0: i32, %arg1: memref<8x26xf32, #tpu.memory_space<vmem>>, %arg2: memref<26x64xf32, #tpu.memory_space<vmem>>, %arg3: memref<1x64xf32, #tpu.memory_space<vmem>>, %arg4: memref<64x1xf32, #tpu.memory_space<vmem>>, %arg5: memref<1x1xf32, #tpu.memory_space<smem>>, %arg6: memref<1x8xf32, #tpu.memory_space<vmem>>) attributes {dimension_semantics = [#tpu.dimension_semantics<parallel>], iteration_bounds = array<i64: 1>, scalar_prefetch = 0 : i64, scratch_operands = 0 : i64, tpu.core_type = #tpu.core_type<tc>, window_params = [{transform_indices = @transform_0, window_bounds = array<i64: 8, 26>}, {pipeline_mode = #tpu.pipeline_mode<synchronous>, transform_indices = @transform_1, window_bounds = array<i64: 26, 64>}, {pipeline_mode = #tpu.pipeline_mode<synchronous>, transform_indices = @transform_2, window_bounds = array<i64: 1, 64>}, {pipeline_mode = #tpu.pipeline_mode<synchronous>, transform_indices = @transform_3, window_bounds = array<i64: 64, 1>}, {transform_indices = @transform_4, window_bounds = array<i64: 1, 1>}, {transform_indices = @transform_5, window_bounds = array<i64: 1, 8>}]} {
    %c0 = arith.constant 0 : index
    %c0_0 = arith.constant 0 : index
    %0 = vector.load %arg1[%c0, %c0_0] : memref<8x26xf32, #tpu.memory_space<vmem>>, vector<8x26xf32>
    %c0_1 = arith.constant 0 : index
    %c0_2 = arith.constant 0 : index
    %1 = vector.load %arg2[%c0_1, %c0_2] : memref<26x64xf32, #tpu.memory_space<vmem>>, vector<26x64xf32>
    %cst = arith.constant dense<0.000000e+00> : vector<8x64xf32>
    %2 = tpu.matmul %0, %1, %cst {dimension_numbers = #tpu.dot_dimension_numbers<[1], [0], [0], [1], [0, 0, 1, 1], [], []>} : vector<8x26xf32>, vector<26x64xf32>, vector<8x64xf32> -> vector<8x64xf32>
    %c0_3 = arith.constant 0 : index
    %c0_4 = arith.constant 0 : index
    %3 = vector.load %arg3[%c0_3, %c0_4] : memref<1x64xf32, #tpu.memory_space<vmem>>, vector<1x64xf32>
    %4 = vector.broadcast %3 : vector<1x64xf32> to vector<8x64xf32>
    %5 = arith.addf %2, %4 : vector<8x64xf32>
    %cst_5 = arith.constant 0.000000e+00 : f32
    %6 = vector.broadcast %cst_5 : f32 to vector<8x64xf32>
    %7 = arith.maximumf %5, %6 : vector<8x64xf32>
    %8 = tpu.transpose %7, [1, 0] : vector<8x64xf32> -> vector<64x8xf32>
    %c0_6 = arith.constant 0 : index
    %c0_7 = arith.constant 0 : index
    %9 = vector.load %arg4[%c0_6, %c0_7] : memref<64x1xf32, #tpu.memory_space<vmem>>, vector<64x1xf32>
    %10 = vector.broadcast %9 : vector<64x1xf32> to vector<64x8xf32>
    %11 = arith.mulf %8, %10 : vector<64x8xf32>
    %cst_8 = arith.constant dense<0.000000e+00> : vector<8xf32>
    %12 = vector.multi_reduction <add>, %11, %cst_8 [0] : vector<64x8xf32> to vector<8xf32>
    %13 = vector.shape_cast %12 : vector<8xf32> to vector<1x8xf32>
    %c0_9 = arith.constant 0 : index
    %c0_10 = arith.constant 0 : index
    %14 = memref.load %arg5[%c0_9, %c0_10] : memref<1x1xf32, #tpu.memory_space<smem>>
    %15 = vector.broadcast %14 : f32 to vector<1x8xf32>
    %16 = arith.addf %13, %15 : vector<1x8xf32>
    %17 = arith.negf %16 : vector<1x8xf32>
    %18 = math.exp %17 : vector<1x8xf32>
    %cst_11 = arith.constant 1.000000e+00 : f32
    %19 = vector.broadcast %cst_11 : f32 to vector<1x8xf32>
    %20 = arith.addf %19, %18 : vector<1x8xf32>
    %21 = arith.divf %19, %20 : vector<1x8xf32>
    %c0_12 = arith.constant 0 : index
    %c0_13 = arith.constant 0 : index
    %22 = vector.load %arg6[%c0_12, %c0_13] : memref<1x8xf32, #tpu.memory_space<vmem>>, vector<1x8xf32>
    tpu.vector_store %arg6[%c0_12, %c0_13], %21 {strides = array<i32>} : memref<1x8xf32, #tpu.memory_space<vmem>>, vector<1x8xf32>,
    return
  }
  func.func @transform_0(%arg0: i32) -> (i32, i32) {
    %c0_i32 = arith.constant 0 : i32
    %c0_i32_0 = arith.constant 0 : i32
    return %arg0, %c0_i32 : i32, i32
  }
  func.func @transform_1(%arg0: i32) -> (i32, i32) {
    %c0_i32 = arith.constant 0 : i32
    %c0_i32_0 = arith.constant 0 : i32
    %c0_i32_1 = arith.constant 0 : i32
    return %c0_i32, %c0_i32_0 : i32, i32
  }
  func.func @transform_2(%arg0: i32) -> (i32, i32) {
    %c0_i32 = arith.constant 0 : i32
    %c0_i32_0 = arith.constant 0 : i32
    %c0_i32_1 = arith.constant 0 : i32
    return %c0_i32, %c0_i32_0 : i32, i32
  }
  func.func @transform_3(%arg0: i32) -> (i32, i32) {
    %c0_i32 = arith.constant 0 : i32
    %c0_i32_0 = arith.constant 0 : i32
    %c0_i32_1 = arith.constant 0 : i32
    return %c0_i32, %c0_i32_0 : i32, i32
  }
  func.func @transform_4(%arg0: i32) -> (i32, i32) {
    %c0_i32 = arith.constant 0 : i32
    %c0_i32_0 = arith.constant 0 : i32
    %c0_i32_1 = arith.constant 0 : i32
    return %c0_i32, %c0_i32_0 : i32, i32
  }
  func.func @transform_5(%arg0: i32) -> (i32, i32) {
    %c0_i32 = arith.constant 0 : i32
    %c0_i32_0 = arith.constant 0 : i32
    return %arg0, %c0_i32 : i32, i32
  }
}

</mosaic_0001>

<llo_original>
// kernel: meta_network_forward.2
$region0: #{meta_network_forward.2}
  #allocation0 [shape = 'u32[]', space=smem, size = 0x4, offset = 0x4, fixed_abs, tag = 'smem constant byte address 0x4 - core index']
  #allocation1 [shape = 'u32[144,128]{1,0:T(1,128)}', space=vmem, size = 0x12000, scoped, tag = 'internal scratch']
  #allocation2 [shape = 'u32[2048]{0}', space=vmem, size = 0x2000, scoped, tag = 'scoped memory for meta_network_forward.2']
  #allocation3 [shape = 'u32[2048]{0}', space=vmem, size = 0x2000, scoped, tag = 'scoped memory for meta_network_forward.2']
  #allocation4 [shape = 'u32[2048]{0}', space=vmem, size = 0x2000, scoped, tag = 'scoped memory for meta_network_forward.2']
  #allocation5 [shape = 'u32[2048]{0}', space=vmem, size = 0x2000, scoped, tag = 'scoped memory for meta_network_forward.2']
  #allocation6 [shape = 'u32[2048]{0}', space=vmem, size = 0x2000, scoped, tag = 'scoped memory for meta_network_forward.2']
  #allocation7 [shape = 'u32[2048]{0}', space=vmem, size = 0x2000, scoped, tag = 'scoped memory for meta_network_forward.2']
  #allocation8 [shape = 'u32[2048]{0}', space=vmem, size = 0x2000, scoped, tag = 'scoped memory for meta_network_forward.2']
  #allocation9 [shape = 'u32[2048]{0}', space=vmem, size = 0x2000, scoped, tag = 'scoped memory for meta_network_forward.2']
  #allocation10 [shape = 'u32[2048]{0}', space=vmem, size = 0x2000, scoped, tag = 'scoped memory for meta_network_forward.2']
  #allocation11 [shape = 'u32[2048]{0}', space=vmem, size = 0x2000, scoped, tag = 'scoped memory for meta_network_forward.2']
  #allocation12 [shape = 'u32[2048]{0}', space=vmem, size = 0x2000, scoped, tag = 'scoped memory for meta_network_forward.2']
  #allocation13 [shape = 'u32[2048]{0}', space=vmem, size = 0x2000, scoped, tag = 'scoped memory for meta_network_forward.2']
  #allocation14 [shape = 'u32[2048]{0}', space=vmem, size = 0x2000, scoped, tag = 'scoped memory for meta_network_forward.2']
  #allocation15 [shape = 'u32[2048]{0}', space=vmem, size = 0x2000, scoped, tag = 'scoped memory for meta_network_forward.2']
  #allocation16 [shape = 'u32[2048]{0}', space=vmem, size = 0x2000, scoped, tag = 'scoped memory for meta_network_forward.2']
  #allocation17 [shape = 'u32[2048]{0}', space=vmem, size = 0x2000, scoped, tag = 'scoped memory for meta_network_forward.2']
  #allocation18 [shape = 'u32[2048]{0}', space=vmem, size = 0x2000, scoped, tag = 'scoped memory for meta_network_forward.2']
  #allocation19 [shape = 'u32[2048]{0}', space=vmem, size = 0x2000, scoped, tag = 'scoped memory for meta_network_forward.2']
  #allocation20 [shape = 'u32[2048]{0}', space=vmem, size = 0x2000, scoped, tag = 'scoped memory for meta_network_forward.2']
  #allocation21 [shape = 'u32[2048]{0}', space=vmem, size = 0x2000, scoped, tag = 'scoped memory for meta_network_forward.2']
  #allocation22 [shape = 'f32[1,1]{1,0:T(1,128)S(6)}', space=smem, size = 0x200, scoped, tag = 'scoped memory for meta_network_forward.2']
  %s0 = inlined_call_operand.vmem [shape: f32[26,64], index: 0, kind: input, shape index: {}]
  %s1 = inlined_call_operand.vmem [shape: f32[1,64], index: 1, kind: input, shape index: {}]
  %s2 = inlined_call_operand.vmem [shape: f32[64,1], index: 2, kind: input, shape index: {}]
  %s3 = inlined_call_operand.<no memory space> [shape: f32[1,1], index: 3, kind: input, shape index: {}]
  %s4 = inlined_call_operand.vmem [shape: f32[8,16], index: 4, kind: input, shape index: {}]
  %s5 = inlined_call_operand.<no memory space> [shape: f32[], index: 5, kind: input, shape index: {}]
  %s6 = inlined_call_operand.vmem [shape: f32[8,8], index: 6, kind: input, shape index: {}]
  %s7 = inlined_call_operand.vmem [shape: f32[8,1], index: 7, kind: input, shape index: {}]
  %s8 = inlined_call_operand.vmem [shape: f32[8,1], index: 8, kind: input, shape index: {}]
  %s9 = inlined_call_operand.hbm [shape: f32[1,8], index: 9, kind: output, shape index: {}]
  %s10 = sld [smem:[#allocation0]]
  $region42: #{meta_network_forward.2} parent=0
    _
  %s12 = ssub.s32 1, %s10
  %s13 = scalar_select 0, %s12, %s10
  %v14 = vstv %s5
  %v15 = vstv %s5
  %v16 = vstv %s5
  %v17 = vstv %s5
  %18 = sst [smem:[#allocation22]] %s3
  $region1: #{meta_network_forward.2} parent=0
    #allocation23 [shape = 'u8[512]{0}', space=vmem, size = 0x400, scoped, tag = 'output window, operand 0, single buffered']
    #allocation24 [shape = 's32[1]{0}', space=sflag, size = 0x4, scoped, tag = 'scoped memory for meta_network_forward.2']
    #allocation25 [shape = 'u8[4096]{0}', space=vmem, size = 0x1000, dematerialized = true, scoped, tag = 'FusionAdapter Buffer %fusion.3 = f32[8,26]{1,0:T(8,128)} fusion(%param_4.2, %param_5.2, %param_6.2, %param_7.3, %param_8.2), kind=kLoop, calls=%fused_computation.9.clone, metadata={op_name="jit(meta_network_forward)/concatenate" stack_frame_id=12}']
    %19 = vsyncpa [#allocation24], 0
    // Predicated region
    $region2: #{meta_network_forward.2} parent=1 // pred_check
      _
    $region3: #{meta_network_forward.2} parent=1 // pred_check_branch
      %21 = sbr.rel (0) target = $region5
    $region4: #{meta_network_forward.2} parent=1 // pred_region
      %s23 = ssub.s32 1, 0
      %s24 = smul.u32 128, %s23
      %p25 = scmp.lt.s32.totalorder 0, 0
      %s26 = scalar_select %p25, 0, 0
      %s27 = smul.addr %s26, 8
      %s28 = scalar_lea.vmem %s4, %s27
      %s30 = ssub.s32 1, 0
      %s31 = smul.u32 128, %s30
    $region5: #{meta_network_forward.2} parent=1 // pred_fallthru
      _
    // Predicated region
    $region6: #{meta_network_forward.2} parent=1 // pred_check
      _
    $region7: #{meta_network_forward.2} parent=1 // pred_check_branch
      %33 = sbr.rel (0) target = $region9
    $region8: #{meta_network_forward.2} parent=1 // pred_region
      %s35 = ssub.s32 1, 0
      %s36 = smul.u32 128, %s35
      %p37 = scmp.lt.s32.totalorder 0, 0
      %s38 = scalar_select %p37, 0, 0
      %s39 = smul.addr %s38, 8
      %s40 = scalar_lea.vmem %s6, %s39
      %s42 = ssub.s32 1, 0
      %s43 = smul.u32 128, %s42
    $region9: #{meta_network_forward.2} parent=1 // pred_fallthru
      _
    // Predicated region
    $region10: #{meta_network_forward.2} parent=1 // pred_check
      _
    $region11: #{meta_network_forward.2} parent=1 // pred_check_branch
      %45 = sbr.rel (0) target = $region13
    $region12: #{meta_network_forward.2} parent=1 // pred_region
      %s47 = ssub.s32 1, 0
      %s48 = smul.u32 128, %s47
      %p49 = scmp.lt.s32.totalorder 0, 0
      %s50 = scalar_select %p49, 0, 0
      %s51 = smul.addr %s50, 8
      %s52 = scalar_lea.vmem %s7, %s51
      %s54 = ssub.s32 1, 0
      %s55 = smul.u32 128, %s54
    $region13: #{meta_network_forward.2} parent=1 // pred_fallthru
      _
    // Predicated region
    $region14: #{meta_network_forward.2} parent=1 // pred_check
      _
    $region15: #{meta_network_forward.2} parent=1 // pred_check_branch
      %57 = sbr.rel (0) target = $region17
    $region16: #{meta_network_forward.2} parent=1 // pred_region
      _
    $region17: #{meta_network_forward.2} parent=1 // pred_fallthru
      _
    // Predicated region
    $region18: #{meta_network_forward.2} parent=1 // pred_check
      _
    $region19: #{meta_network_forward.2} parent=1 // pred_check_branch
      %59 = sbr.rel (0) target = $region21
    $region20: #{meta_network_forward.2} parent=1 // pred_region
      _
    $region21: #{meta_network_forward.2} parent=1 // pred_fallthru
      _
    // Predicated region
    $region22: #{meta_network_forward.2} parent=1 // pred_check
      _
    $region23: #{meta_network_forward.2} parent=1 // pred_check_branch
      %61 = sbr.rel (0) target = $region25
    $region24: #{meta_network_forward.2} parent=1 // pred_region
      _
    $region25: #{meta_network_forward.2} parent=1 // pred_fallthru
      _
    // Predicated region
    $region26: #{meta_network_forward.2} parent=1 // pred_check
      _
    $region27: #{meta_network_forward.2} parent=1 // pred_check_branch
      %63 = sbr.rel (0) target = $region29
    $region28: #{meta_network_forward.2} parent=1 // pred_region
      _
    $region29: #{meta_network_forward.2} parent=1 // pred_fallthru
      _
    // Predicated region
    $region30: #{meta_network_forward.2} parent=1 // pred_check
      _
    $region31: #{meta_network_forward.2} parent=1 // pred_check_branch
      %65 = sbr.rel (0) target = $region33
    $region32: #{meta_network_forward.2} parent=1 // pred_region
      _
    $region33: #{meta_network_forward.2} parent=1 // pred_fallthru
      _
    %s67 = ssub.s32 1, 0
    %s68 = smul.u32 128, %s67
    %p69 = scmp.lt.s32.totalorder 0, 0
    %s70 = scalar_select %p69, 0, 0
    %s71 = smul.addr %s70, 8
    %s72 = scalar_lea.vmem %s4, %s71
    %s74 = ssub.s32 1, 0
    %s75 = smul.u32 128, %s74
    %p76 = scmp.lt.s32.totalorder 0, 0
    %s77 = scalar_select %p76, 0, 0
    %s78 = smul.addr %s77, 8
    %s79 = scalar_lea.vmem %s6, %s78
    %s81 = ssub.s32 1, 0
    %s82 = smul.u32 128, %s81
    %p83 = scmp.lt.s32.totalorder 0, 0
    %s84 = scalar_select %p83, 0, 0
    %s85 = smul.addr %s84, 8
    %s86 = scalar_lea.vmem %s7, %s85
    %s88 = ssub.s32 1, 0
    %s89 = smul.u32 128, %s88
    %p90 = scmp.lt.s32.totalorder 0, 0
    %s91 = scalar_select %p90, 0, 0
    %s92 = smul.addr %s91, 8
    %s93 = scalar_lea.vmem %s4, %s92
    %s95 = ssub.s32 1, 0
    %s96 = smul.u32 128, %s95
    %s98 = ssub.s32 1, 0
    %s99 = smul.u32 128, %s98
    %p100 = scmp.lt.s32.totalorder 0, 0
    %s101 = scalar_select %p100, 0, 0
    %s102 = smul.addr %s101, 8
    %s103 = scalar_lea.vmem %s6, %s102
    %s105 = ssub.s32 1, 0
    %s106 = smul.u32 128, %s105
    %s108 = ssub.s32 1, 0
    %s109 = smul.u32 128, %s108
    %p110 = scmp.lt.s32.totalorder 0, 0
    %s111 = scalar_select %p110, 0, 0
    %s112 = smul.addr %s111, 8
    %s113 = scalar_lea.vmem %s7, %s112
    %s115 = ssub.s32 1, 0
    %s116 = smul.u32 128, %s115
    %s117 = ssub.s32 0, 0
    %p118 = scmp.lt.s32.totalorder %s117, 0
    %s119 = scalar_select %p118, 0, 255
    %v120 = vld [vmem:[%s93] sm:%s119]
    %v121 = vlaneseq
    %v122 = vand.u32 %v121, 127
    %v123 = vadd.s32 %v122, 128
    %vm124 = vcmp.lt.s32.totalorder %v123, 144
    %v125 = vsel %vm124, %v120, %v14
    %v126 = vlaneseq
    %v127 = vand.u32 %v126, 127
    %vm128 = vcmp.lt.s32.totalorder %v127, 118
    %v129 = vsel %vm128, %v125, %v14
    %130 = vrot.lane.b32.xlu0 %v129, 10
    %v131 = vpop.permute.xlu0 %130
    %s132 = ssub.s32 0, 0
    %p133 = scmp.lt.s32.totalorder %s132, 0
    %s134 = scalar_select %p133, 0, 255
    %v135 = vld [vmem:[%s103] sm:%s134]
    %v136 = vlaneseq
    %v137 = vand.u32 %v136, 127
    %v138 = vadd.s32 %v137, 128
    %vm139 = vcmp.lt.s32.totalorder %v138, 136
    %v140 = vsel %vm139, %v135, %v15
    %v141 = vlaneseq
    %v142 = vand.u32 %v141, 127
    %vm143 = vcmp.lt.s32.totalorder %v142, 126
    %v144 = vsel %vm143, %v140, %v15
    %145 = vrot.lane.b32.xlu0 %v144, 2
    %v146 = vpop.permute.xlu0 %145
    %s147 = ssub.s32 0, 0
    %p148 = scmp.lt.s32.totalorder %s147, 0
    %s149 = scalar_select %p148, 0, 255
    %v150 = vld [vmem:[%s113] sm:%s149]
    %v151 = vlaneseq
    %v152 = vand.u32 %v151, 127
    %v153 = vadd.s32 %v152, 128
    %vm154 = vcmp.lt.s32.totalorder %v153, 129
    %v155 = vsel %vm154, %v150, %v16
    %v156 = vlaneseq
    %v157 = vand.u32 %v156, 127
    %vm158 = vcmp.lt.s32.totalorder %v157, 127
    %v159 = vsel %vm158, %v155, %v16
    %160 = vrot.lane.b32.xlu0 %v159, 1
    %v161 = vpop.permute.xlu0 %160
    %v162 = vld [vmem:[%s8] sm:$0xff]
    %v163 = vlaneseq
    %v164 = vand.u32 %v163, 127
    %vm166 = vcmp.lt.s32.totalorder %v164, 1
    %v167 = vsel %vm166, %v162, %v17
    %168 = xla_tuple %v167, %v161
    %169 = xla_tuple %168
    %v170 = vmax.f32 %v167, %v161
    %171 = xla_tuple %v170
    %172 = xla_tuple %v170, %v146
    %173 = xla_tuple %172
    %v174 = vmax.f32 %v170, %v146
    %175 = xla_tuple %v174
    %176 = xla_tuple %v174, %v131
    %177 = xla_tuple %176
    %v178 = vmax.f32 %v174, %v131
    %179 = xla_tuple %v178
    %181 = vst [vmem:[#allocation25] sm:$0xff] %v178
    %v182 = vld [vmem:[#allocation25] sm:$0xff]
    %v183 = vld [vmem:[%s0] sm:$0xff]
    %v184 = vld [vmem:[%s0 + $0x8] sm:$0xff]
    %v185 = vld [vmem:[%s0 + $0x10] sm:$0xff]
    %v186 = vld [vmem:[%s0 + $0x18] sm:$0x3]
    %v187 = vld [vmem:[%s1] sm:$0x1]
    %v189 = vlaneseq
    %v190 = vshrl.u32 %v189, 7
    %v191 = vsub.s32 0, %v190
    %v192 = vrot.slane %v187, %v191
    %vm194 = vcmask 211968
    %v196 = vsel %vm194, %v182, 0
    %vm198 = vcmask 1041408
    %v200 = vsel %vm198, %v186, 0
    %202 = vmatprep.subr.mxu0 0.0
    %203 = vmatpush1.msra.mxu0 %v183
    %204 = vmatprep.subr.mxu0 0.0
    %205 = vmatpush1.msra.mxu0 %v184
    %206 = vmatprep.subr.mxu0 0.0
    %207 = vmatpush1.msra.mxu0 %v185
    %208 = vmatprep.subr.mxu0 0.0
    %209 = vmatpush1.msra.mxu0 %v200
    %210 = vmatprep.subr.mxu0 0.0
    %211 = vmatpush1.msra.mxu0 0.0
    %212 = vmatprep.subr.mxu0 0.0
    %213 = vmatpush1.msra.mxu0 0.0
    %214 = vmatprep.subr.mxu0 0.0
    %215 = vmatpush1.msra.mxu0 0.0
    %216 = vmatprep.subr.mxu0 0.0
    %217 = vmatpush1.msra.mxu0 0.0
    %218 = vmatprep.subr.mxu0 0.0
    %219 = vmatpush1.msra.mxu0 0.0
    %220 = vmatprep.subr.mxu0 0.0
    %221 = vmatpush1.msra.mxu0 0.0
    %222 = vmatprep.subr.mxu0 0.0
    %223 = vmatpush1.msra.mxu0 0.0
    %224 = vmatprep.subr.mxu0 0.0
    %225 = vmatpush1.msra.mxu0 0.0
    %226 = vmatprep.subr.mxu0 0.0
    %227 = vmatpush1.msra.mxu0 0.0
    %228 = vmatprep.subr.mxu0 0.0
    %229 = vmatpush1.msra.mxu0 0.0
    %230 = vmatprep.subr.mxu0 0.0
    %231 = vmatpush1.msra.mxu0 0.0
    %232 = vmatprep.subr.mxu0 0.0
    %233 = vmatpush1.msra.mxu0 0.0
    %234 = vmatprep.subr.mxu0 0.0
    %235 = vmatpush1.msra.mxu0 0.0
    %236 = vmatprep.subr.mxu0 0.0
    %237 = vmatpush1.msra.mxu0 0.0
    %238 = vmatprep.subr.mxu0 0.0
    %239 = vmatpush1.msra.mxu0 0.0
    %240 = vmatprep.subr.mxu0 0.0
    %241 = vmatpush1.msra.mxu0 0.0
    %242 = vmatprep.subr.mxu0 0.0
    %243 = vmatpush1.msra.mxu0 0.0
    %244 = vmatprep.subr.mxu0 0.0
    %245 = vmatpush1.msra.mxu0 0.0
    %246 = vmatprep.subr.mxu0 0.0
    %247 = vmatpush1.msra.mxu0 0.0
    %248 = vmatprep.subr.mxu0 0.0
    %249 = vmatpush1.msra.mxu0 0.0
    %250 = vmatprep.subr.mxu0 0.0
    %251 = vmatpush1.msra.mxu0 0.0
    %252 = vmatprep.subr.mxu0 0.0
    %253 = vmatpush1.msra.mxu0 0.0
    %254 = vmatprep.subr.mxu0 0.0
    %255 = vmatpush1.msra.mxu0 0.0
    %256 = vmatprep.subr.mxu0 0.0
    %257 = vmatpush1.msra.mxu0 0.0
    %258 = vmatprep.subr.mxu0 0.0
    %259 = vmatpush1.msra.mxu0 0.0
    %260 = vmatprep.subr.mxu0 0.0
    %261 = vmatpush1.msra.mxu0 0.0
    %262 = vmatprep.subr.mxu0 0.0
    %263 = vmatpush1.msra.mxu0 0.0
    %264 = vmatprep.subr.mxu0 0.0
    %265 = vmatpush1.msra.mxu0 0.0
    %266 = vmatprep.mubr.f32.mxu0 0.0
    %267 = vmatmul.mubr.f32.gmra.mrb[0].mxu0 %v196
    %v268 = vpop.f32.mrb[0].mxu0
    %v269 = vadd.f32 %v192, %v268
    %v270 = vpop.f32.mrb[0].mxu0
    %271 = vdwg.mxu0
    %v272 = vmax.f32 %v269, 0.0
    %273 = vxpose.xlu0.b32.start [1/16] %v272, 128
    %274 = vxpose.xlu0.b32.cont [2/16] 0.0, 128
    %275 = vxpose.xlu0.b32.cont [3/16] 0.0, 128
    %276 = vxpose.xlu0.b32.cont [4/16] 0.0, 128
    %277 = vxpose.xlu0.b32.cont [5/16] 0.0, 128
    %278 = vxpose.xlu0.b32.cont [6/16] 0.0, 128
    %279 = vxpose.xlu0.b32.cont [7/16] 0.0, 128
    %280 = vxpose.xlu0.b32.cont [8/16] 0.0, 128
    %281 = vxpose.xlu0.b32.cont [9/16] 0.0, 128
    %282 = vxpose.xlu0.b32.cont [10/16] 0.0, 128
    %283 = vxpose.xlu0.b32.cont [11/16] 0.0, 128
    %284 = vxpose.xlu0.b32.cont [12/16] 0.0, 128
    %285 = vxpose.xlu0.b32.cont [13/16] 0.0, 128
    %286 = vxpose.xlu0.b32.cont [14/16] 0.0, 128
    %287 = vxpose.xlu0.b32.cont [15/16] 0.0, 128
    %288 = vxpose.xlu0.b32.end [16/16] 0.0, 128
    %v289 = vpop.trf.xlu0
    %v290 = vpop.trf.xlu0
    %v291 = vpop.trf.xlu0
    %v292 = vpop.trf.xlu0
    %v293 = vpop.trf.xlu0
    %v294 = vpop.trf.xlu0
    %v295 = vpop.trf.xlu0
    %v296 = vpop.trf.xlu0
    %v297 = vpop.trf.xlu0
    %v298 = vpop.trf.xlu0
    %v299 = vpop.trf.xlu0
    %v300 = vpop.trf.xlu0
    %v301 = vpop.trf.xlu0
    %v302 = vpop.trf.xlu0
    %v303 = vpop.trf.xlu0
    %v304 = vpop.trf.xlu0
    %v305 = vld [vmem:[%s2] sm:$0xff]
    %v306 = vld [vmem:[%s2 + $0x8] sm:$0xff]
    %v307 = vld [vmem:[%s2 + $0x10] sm:$0xff]
    %v308 = vld [vmem:[%s2 + $0x18] sm:$0xff]
    %v309 = vld [vmem:[%s2 + $0x20] sm:$0xff]
    %v310 = vld [vmem:[%s2 + $0x28] sm:$0xff]
    %v311 = vld [vmem:[%s2 + $0x30] sm:$0xff]
    %v312 = vld [vmem:[%s2 + $0x38] sm:$0xff]
    %314 = vset.pattern.permute.xlu0 0
    %315 = vperm.xlu0 %314, %v305
    %v316 = vpop.permute.xlu0 %315
    %319 = vset.pattern.permute.xlu0 0
    %320 = vperm.xlu0 %319, %v306
    %v321 = vpop.permute.xlu0 %320
    %324 = vset.pattern.permute.xlu0 0
    %325 = vperm.xlu0 %324, %v307
    %v326 = vpop.permute.xlu0 %325
    %329 = vset.pattern.permute.xlu0 0
    %330 = vperm.xlu0 %329, %v308
    %v331 = vpop.permute.xlu0 %330
    %334 = vset.pattern.permute.xlu0 0
    %335 = vperm.xlu0 %334, %v309
    %v336 = vpop.permute.xlu0 %335
    %339 = vset.pattern.permute.xlu0 0
    %340 = vperm.xlu0 %339, %v310
    %v341 = vpop.permute.xlu0 %340
    %344 = vset.pattern.permute.xlu0 0
    %345 = vperm.xlu0 %344, %v311
    %v346 = vpop.permute.xlu0 %345
    %349 = vset.pattern.permute.xlu0 0
    %350 = vperm.xlu0 %349, %v312
    %v351 = vpop.permute.xlu0 %350
    %v353 = vmul.f32 %v289, %v316
    %v354 = vmul.f32 %v290, %v321
    %v355 = vmul.f32 %v291, %v326
    %v356 = vmul.f32 %v292, %v331
    %v357 = vmul.f32 %v293, %v336
    %v358 = vmul.f32 %v294, %v341
    %v359 = vmul.f32 %v295, %v346
    %v360 = vmul.f32 %v296, %v351
    %vm361 = vcmask 64512
    %v362 = vsel %vm361, %v353, 0.0
    %v363 = vsel %vm361, %v354, 0.0
    %v364 = vadd.f32 %v362, %v363
    %v365 = vsel %vm361, %v355, 0.0
    %v366 = vadd.f32 %v364, %v365
    %v367 = vsel %vm361, %v356, 0.0
    %v368 = vadd.f32 %v366, %v367
    %v369 = vsel %vm361, %v357, 0.0
    %v370 = vadd.f32 %v368, %v369
    %v371 = vsel %vm361, %v358, 0.0
    %v372 = vadd.f32 %v370, %v371
    %v373 = vsel %vm361, %v359, 0.0
    %v374 = vadd.f32 %v372, %v373
    %v375 = vsel %vm361, %v360, 0.0
    %v376 = vadd.f32 %v374, %v375
    %v377 = vrot.slane %v376, 4
    %v378 = vadd.f32 %v376, %v377
    %v379 = vrot.slane %v378, 2
    %v380 = vadd.f32 %v378, %v379
    %v381 = vrot.slane %v380, 1
    %v382 = vadd.f32 %v380, %v381
    %s383 = sld [smem:[#allocation22]]
    %v384 = vstv %s383
    %v385 = vadd.f32 %v382, %v384
    %v386 = vxor.u32 %v385, 2147483648
    %v387 = vmul.f32 %v386, 1.442695
    %v388 = vpow.pop %v387
    %v389 = vadd.f32 %v388, 1.0
    %v390 = vrcp.pop %v389
    %v391 = vmul.f32 1.0, %v390
    %vm392 = vcmask 57344
    %393 = vst.msk [vmem:[#allocation23] sm:$0x1] %vm392, %v391
    // Predicated region
    $region34: #{meta_network_forward.2} parent=1 // pred_check
      _
    $region35: #{meta_network_forward.2} parent=1 // pred_check_branch
      %395 = sbr.rel (0) target = $region37
    $region36: #{meta_network_forward.2} parent=1 // pred_region
      %s397 = ssub.s32 16, 16
      %398 = vsyncadd [#allocation24], %s397
      %s400 = sshll.u32 [#allocation23], 4
      %s401 = int_to_ptr.vmem [resolvable:$true] %s400
      %403 = dma.vmem_to_hbm [thread:$0]  %s401, 16, %s9, [#allocation24]
    $region37: #{meta_network_forward.2} parent=1 // pred_fallthru
      _
    // Predicated region
    $region38: #{meta_network_forward.2} parent=1 // pred_check
      _
    $region39: #{meta_network_forward.2} parent=1 // pred_check_branch
      %405 = sbr.rel (0) target = $region41
    $region40: #{meta_network_forward.2} parent=1 // pred_region
      %406 = dma.done [#allocation24], 16
    $region41: #{meta_network_forward.2} parent=1 // pred_fallthru
      _
    %407 = vsyncpa [#allocation24], 1

</llo_original>
